<compile_context>
chip_gen: v5e
topology: v5e:2x2
jax: 0.10.0
libtpu: 0.0.40
codegen_flags: <defaults>
</compile_context>

<pallas_src>
import functools

import jax
import jax.numpy as jnp
import numpy as np
from jax.experimental import pallas as pl
from jax.experimental.pallas import tpu as pltpu


# Column layout of the packed "small" slab (shape (64, 16), f32).
_C_W1X = slice(0, 4)     # layer1[0] weight, x part            (64, 4)
_C_W1T = slice(4, 5)     # layer1[0] weight, temb part         (64, 1)
_C_W3T = slice(5, 6)     # layer3[0] weight, temb part         (64, 1)
_C_B1 = slice(6, 7)      # layer1[0] bias
_C_B1B = slice(7, 8)     # layer1[2] bias
_C_B2A = slice(8, 9)     # layer2[0] bias
_C_B2B = slice(9, 10)    # layer2[2] bias
_C_B3 = slice(10, 11)    # layer3[0] bias
_C_B3B = slice(11, 12)   # layer3[2] bias
_C_BL = slice(12, 13)    # last_layer bias (rows 0:4 valid, rows 4:8 zero)


def noise_model_kernel(n_steps, tp_ref, x_ref, t_ref, wbig_ref, wsmall_ref,
                       wlast_ref, o_ref):
    f32 = jnp.float32
    x = x_ref[...].astype(f32)                        # (4, bm)   batch on lanes
    t = t_ref[...].astype(f32)                        # (1, bm)
    ws = wsmall_ref[...]                              # (64, 16)  packed vectors

    # t_layer: t/n_steps - 0.5, then two scalar Linear(1,1)+ReLU stages (SMEM scalars).
    tn = t / float(n_steps) - 0.5
    temb = jnp.maximum(tn * tp_ref[0] + tp_ref[1], 0.0)
    temb = jnp.maximum(temb * tp_ref[2] + tp_ref[3], 0.0)        # (1, bm)

    # layer1[0]: Linear(4+1, 64) as 5 VPU broadcast multiply-adds (K=4 is far too
    # small to be worth an MXU pass); temb term and bias folded in.
    h = ws[:, _C_W1T] * temb + ws[:, _C_B1]                       # (64, bm)
    for k in range(4):                                            # static unroll
        h = h + ws[:, k:k + 1] * x[k:k + 1, :]
    h = jnp.maximum(h, 0.0)
    # layer1[2]: Linear(64, 64) + ReLU
    h = jnp.maximum(
        jnp.dot(wbig_ref[0], h, preferred_element_type=f32) + ws[:, _C_B1B], 0.0)

    # layer2: Linear(64, 64) + ReLU -> Linear(64, 64) + ReLU
    h = jnp.maximum(
        jnp.dot(wbig_ref[1], h, preferred_element_type=f32) + ws[:, _C_B2A], 0.0)
    h = jnp.maximum(
        jnp.dot(wbig_ref[2], h, preferred_element_type=f32) + ws[:, _C_B2B], 0.0)

    # layer3: Linear(64+1, 64) + ReLU -> Linear(64, 64) + Tanh
    h = jnp.dot(wbig_ref[3], h, preferred_element_type=f32)
    h = jnp.maximum(h + ws[:, _C_W3T] * temb + ws[:, _C_B3], 0.0)
    h = jnp.tanh(
        jnp.dot(wbig_ref[4], h, preferred_element_type=f32) + ws[:, _C_B3B])

    # last_layer: Linear(64, 4); weight padded only to (8, 64) (sublane aligned).
    out = jnp.dot(wlast_ref[...], h, preferred_element_type=f32) + ws[:8, _C_BL]
    o_ref[...] = out[:4, :].astype(o_ref.dtype)       # lane-dense (4, bm) store


def init_raw_params(key, w=64, t_w=1):
    """PyTorch-style init (uniform +-1/sqrt(fan_in)); weights in [out, in] order."""
    def lin(k, fan_in, fan_out):
        k1, k2 = jax.random.split(k)
        bound = 1.0 / np.sqrt(fan_in)
        W = jax.random.uniform(k1, (fan_out, fan_in), jnp.float32, -bound, bound)
        b = jax.random.uniform(k2, (fan_out,), jnp.float32, -bound, bound)
        return W, b

    ks = jax.random.split(key, 9)
    raw = {}
    raw["Wt0"], raw["bt0"] = lin(ks[0], 1, t_w)          # t_layer[0]
    raw["Wt1"], raw["bt1"] = lin(ks[1], t_w, t_w)        # t_layer[2]
    raw["W1"], raw["b1"] = lin(ks[2], 4 + t_w, w)        # layer1[0]  (cols: x | temb)
    raw["W1b"], raw["b1b"] = lin(ks[3], w, w)            # layer1[2]
    raw["W2a"], raw["b2a"] = lin(ks[4], w, w)            # layer2[0]
    raw["W2b"], raw["b2b"] = lin(ks[5], w, w)            # layer2[2]
    raw["W3"], raw["b3"] = lin(ks[6], w + t_w, w)        # layer3[0]  (cols: h | temb)
    raw["W3b"], raw["b3b"] = lin(ks[7], w, w)            # layer3[2]
    raw["WL"], raw["bL"] = lin(ks[8], w, 4)              # last_layer
    return raw


def pack_params(raw, w=64):
    """Pack the 16 weight/bias tensors into three slabs + 4 SMEM scalars."""
    wbig = jnp.stack([raw["W1b"], raw["W2a"], raw["W2b"],
                      raw["W3"][:, :w], raw["W3b"]])              # (5, 64, 64)
    wlast = jnp.zeros((8, w), jnp.float32).at[:4, :].set(raw["WL"])  # (8, 64)

    wsmall = jnp.zeros((w, 16), jnp.float32)
    wsmall = wsmall.at[:, _C_W1X].set(raw["W1"][:, :4])
    wsmall = wsmall.at[:, _C_W1T].set(raw["W1"][:, 4:5])
    wsmall = wsmall.at[:, _C_W3T].set(raw["W3"][:, w:w + 1])
    wsmall = wsmall.at[:, _C_B1].set(raw["b1"][:, None])
    wsmall = wsmall.at[:, _C_B1B].set(raw["b1b"][:, None])
    wsmall = wsmall.at[:, _C_B2A].set(raw["b2a"][:, None])
    wsmall = wsmall.at[:, _C_B2B].set(raw["b2b"][:, None])
    wsmall = wsmall.at[:, _C_B3].set(raw["b3"][:, None])
    wsmall = wsmall.at[:, _C_B3B].set(raw["b3b"][:, None])
    wsmall = wsmall.at[:4, _C_BL].set(raw["bL"][:, None])

    tparams = jnp.array([raw["Wt0"][0, 0], raw["bt0"][0],
                         raw["Wt1"][0, 0], raw["bt1"][0]], jnp.float32)
    return {"tparams": tparams, "wbig": wbig, "wsmall": wsmall, "wlast": wlast}


def noise_model_ref(raw, x, t, n_steps):
    """Pure-JAX replica of the PyTorch forward (with the original concats)."""
    tn = t.astype(jnp.float32) / n_steps - 0.5
    temb = jnp.maximum(tn @ raw["Wt0"].T + raw["bt0"], 0.0)
    temb = jnp.maximum(temb @ raw["Wt1"].T + raw["bt1"], 0.0)
    h = jnp.concatenate([x, temb], axis=-1)
    h = jnp.maximum(h @ raw["W1"].T + raw["b1"], 0.0)
    h = jnp.maximum(h @ raw["W1b"].T + raw["b1b"], 0.0)
    h = jnp.maximum(h @ raw["W2a"].T + raw["b2a"], 0.0)
    h = jnp.maximum(h @ raw["W2b"].T + raw["b2b"], 0.0)
    h = jnp.concatenate([h, temb], axis=-1)
    h = jnp.maximum(h @ raw["W3"].T + raw["b3"], 0.0)
    h = jnp.tanh(h @ raw["W3b"].T + raw["b3b"])
    return h @ raw["WL"].T + raw["bL"]


def _round_up(x, m):
    return ((x + m - 1) // m) * m


def _tpu_topology():
    """(tensorcores per chip, VMEM bytes per core), with conservative fallbacks."""
    num_cores, vmem_bytes = 1, 128 * 1024 * 1024
    try:
        info = pltpu.get_tpu_info()
        for f in ("vmem_capacity_bytes", "vmem_bytes"):
            v = getattr(info, f, None)
            if v:
                vmem_bytes = int(v)
                break
        for f in ("num_cores", "tensorcores_per_chip", "cores_per_chip"):
            v = getattr(info, f, None)
            if v:
                num_cores = int(v)
                break
    except Exception:
        pass
    try:
        kind = jax.devices()[0].device_kind.lower()
    except Exception:
        kind = ""
    if "7" in kind:   # v7x: 2 TensorCores / chip, 64 MiB VMEM per TC
        num_cores = max(num_cores, 2)
        vmem_bytes = min(vmem_bytes, 64 * 1024 * 1024)
    return num_cores, vmem_bytes


def _choose_tile(batch, num_cores, vmem_bytes):
    """Return (bm, padded_batch): the largest lane-dense batch tile the VMEM
    budget allows, with >=2 'parallel' grid steps only on 2-TensorCore chips."""
    lane = 128
    # Bytes per batch column: double-buffered x/t/out blocks (9 f32 each) plus
    # ~8 live (64, bm) f32 intermediates; the ~90 KB of weights are noise.
    bytes_per_col = (4 + 1 + 4) * 4 * 2 + 8 * 64 * 4
    cap = (int(0.5 * vmem_bytes) // bytes_per_col) // lane * lane
    cap = max(lane, min(cap, 16384))          # diminishing returns past ~16k cols
    if batch <= lane:
        return batch, batch                   # single step; block == full array
    min_steps = 2 if (num_cores >= 2 and batch >= 2 * lane) else 1
    steps = max(min_steps, -(-batch // cap))  # ceil
    bm = min(cap, _round_up(-(-batch // steps), lane))
    padded = _round_up(batch, bm)
    return bm, padded


def noise_model_forward(params, x, t, n_steps, bm=None):
    B = x.shape[0]
    num_cores, vmem_bytes = _tpu_topology()
    if bm is None:
        bm, Bp = _choose_tile(B, num_cores, vmem_bytes)
    else:
        Bp = _round_up(B, bm)

    # Layout plumbing: put batch on the 128-lane axis, zero-pad awkward batches.
    xT = jnp.transpose(x.astype(jnp.float32))            # (4, B)
    tT = jnp.reshape(t.astype(jnp.float32), (1, B))      # (1, B)
    if Bp != B:
        xT = jnp.pad(xT, ((0, 0), (0, Bp - B)))
        tT = jnp.pad(tT, ((0, 0), (0, Bp - B)))

    wbig, wsmall, wlast = params["wbig"], params["wsmall"], params["wlast"]

    smem_spec = pl.BlockSpec(memory_space=pltpu.MemorySpace.SMEM)
    x_spec = pl.BlockSpec((4, bm), lambda i: (0, i))
    t_spec = pl.BlockSpec((1, bm), lambda i: (0, i))
    wbig_spec = pl.BlockSpec(wbig.shape, lambda i: (0, 0, 0))
    wsmall_spec = pl.BlockSpec(wsmall.shape, lambda i: (0, 0))
    wlast_spec = pl.BlockSpec(wlast.shape, lambda i: (0, 0))
    out_spec = pl.BlockSpec((4, bm), lambda i: (0, i))

    vmem_limit = int(min(0.75 * vmem_bytes, 64 * 1024 * 1024))

    kernel = functools.partial(noise_model_kernel, n_steps)

    outT = pl.pallas_call(
        kernel,
        out_shape=jax.ShapeDtypeStruct((4, Bp), jnp.float32),
        grid=(Bp // bm,),
        in_specs=[smem_spec, x_spec, t_spec, wbig_spec, wsmall_spec, wlast_spec],
        out_specs=out_spec,
        compiler_params=pltpu.CompilerParams(
            dimension_semantics=("parallel",),
            vmem_limit_bytes=vmem_limit),
    )(params["tparams"], xT, tT, wbig, wsmall, wlast)
    return jnp.transpose(outT[:, :B])                     # back to (B, 4)


if __name__ == "__main__":
    n_steps = 100
    key = jax.random.PRNGKey(0)
    k_params, k_data = jax.random.split(key)

    raw = init_raw_params(k_params)
    packed = pack_params(raw)

    # jit the wrapper so the layout transposes fuse with neighbouring ops
    # instead of running as standalone dispatches around the kernel.
    fwd = jax.jit(functools.partial(noise_model_forward, n_steps=n_steps))

    # B=64  -> single small step (block == full array, non-128 batch path)
    # B=256 -> 2 lane-dense "parallel" steps on 2-TC chips, 1 step otherwise
    # B=300 -> exercises the zero-padding path in the wrapper
    for B in (64, 256, 300):
        kx, kt = jax.random.split(jax.random.fold_in(k_data, B))
        x = jax.random.normal(kx, (B, 4), jnp.float32)
        # integer timesteps in [0, n_steps), cast to float (matches t.float())
        t = jax.random.randint(kt, (B, 1), 0, n_steps).astype(jnp.float32)

        out = jax.block_until_ready(fwd(packed, x, t))
        ref = noise_model_ref(raw, x, t, n_steps)
        # Default (validated) matmul precision is kept in the kernel; atol has a
        # small margin for cross-generation f32-on-MXU multi-pass differences.
        np.testing.assert_allclose(np.asarray(out), np.asarray(ref),
                                   rtol=1e-5, atol=2e-5)

    print("KERNEL_OK")
</pallas_src>

<mosaic_0001>
module attributes {stable_mosaic.version = 11 : i64} {
  func.func @noise_model_kernel(%arg0: i32, %arg1: memref<4xf32, #tpu.memory_space<smem>>, %arg2: memref<4x64xf32, #tpu.memory_space<vmem>>, %arg3: memref<1x64xf32, #tpu.memory_space<vmem>>, %arg4: memref<5x64x64xf32, #tpu.memory_space<vmem>>, %arg5: memref<64x16xf32, #tpu.memory_space<vmem>>, %arg6: memref<8x64xf32, #tpu.memory_space<vmem>>, %arg7: memref<4x64xf32, #tpu.memory_space<vmem>>) attributes {dimension_semantics = [#tpu.dimension_semantics<parallel>], iteration_bounds = array<i64: 1>, scalar_prefetch = 0 : i64, scratch_operands = 0 : i64, tpu.core_type = #tpu.core_type<tc>, window_params = [{transform_indices = @transform_0, window_bounds = array<i64: 4>}, {transform_indices = @transform_1, window_bounds = array<i64: 4, 64>}, {transform_indices = @transform_2, window_bounds = array<i64: 1, 64>}, {pipeline_mode = #tpu.pipeline_mode<synchronous>, transform_indices = @transform_3, window_bounds = array<i64: 5, 64, 64>}, {pipeline_mode = #tpu.pipeline_mode<synchronous>, transform_indices = @transform_4, window_bounds = array<i64: 64, 16>}, {pipeline_mode = #tpu.pipeline_mode<synchronous>, transform_indices = @transform_5, window_bounds = array<i64: 8, 64>}, {transform_indices = @transform_6, window_bounds = array<i64: 4, 64>}]} {
    %c0 = arith.constant 0 : index
    %c0_0 = arith.constant 0 : index
    %0 = vector.load %arg2[%c0, %c0_0] : memref<4x64xf32, #tpu.memory_space<vmem>>, vector<4x64xf32>
    %c0_1 = arith.constant 0 : index
    %c0_2 = arith.constant 0 : index
    %1 = vector.load %arg3[%c0_1, %c0_2] : memref<1x64xf32, #tpu.memory_space<vmem>>, vector<1x64xf32>
    %c0_3 = arith.constant 0 : index
    %c0_4 = arith.constant 0 : index
    %2 = vector.load %arg5[%c0_3, %c0_4] : memref<64x16xf32, #tpu.memory_space<vmem>>, vector<64x16xf32>
    %cst = arith.constant 1.000000e+02 : f32
    %3 = vector.broadcast %cst : f32 to vector<1x64xf32>
    %4 = arith.divf %1, %3 : vector<1x64xf32>
    %cst_5 = arith.constant 5.000000e-01 : f32
    %5 = vector.broadcast %cst_5 : f32 to vector<1x64xf32>
    %6 = arith.subf %4, %5 : vector<1x64xf32>
    %c0_6 = arith.constant 0 : index
    %7 = memref.load %arg1[%c0_6] : memref<4xf32, #tpu.memory_space<smem>>
    %8 = vector.broadcast %7 : f32 to vector<1x64xf32>
    %9 = arith.mulf %6, %8 : vector<1x64xf32>
    %c1 = arith.constant 1 : index
    %10 = memref.load %arg1[%c1] : memref<4xf32, #tpu.memory_space<smem>>
    %11 = vector.broadcast %10 : f32 to vector<1x64xf32>
    %12 = arith.addf %9, %11 : vector<1x64xf32>
    %cst_7 = arith.constant 0.000000e+00 : f32
    %13 = vector.broadcast %cst_7 : f32 to vector<1x64xf32>
    %14 = arith.maximumf %12, %13 : vector<1x64xf32>
    %c2 = arith.constant 2 : index
    %15 = memref.load %arg1[%c2] : memref<4xf32, #tpu.memory_space<smem>>
    %16 = vector.broadcast %15 : f32 to vector<1x64xf32>
    %17 = arith.mulf %14, %16 : vector<1x64xf32>
    %c3 = arith.constant 3 : index
    %18 = memref.load %arg1[%c3] : memref<4xf32, #tpu.memory_space<smem>>
    %19 = vector.broadcast %18 : f32 to vector<1x64xf32>
    %20 = arith.addf %17, %19 : vector<1x64xf32>
    %cst_8 = arith.constant 0.000000e+00 : f32
    %21 = vector.broadcast %cst_8 : f32 to vector<1x64xf32>
    %22 = arith.maximumf %20, %21 : vector<1x64xf32>
    %23 = vector.extract_strided_slice %2 {offsets = [0, 4], sizes = [64, 1], strides = [1, 1]} : vector<64x16xf32> to vector<64x1xf32>
    %24 = vector.broadcast %23 : vector<64x1xf32> to vector<64x64xf32>
    %25 = vector.broadcast %22 : vector<1x64xf32> to vector<64x64xf32>
    %26 = arith.mulf %24, %25 : vector<64x64xf32>
    %27 = vector.extract_strided_slice %2 {offsets = [0, 6], sizes = [64, 1], strides = [1, 1]} : vector<64x16xf32> to vector<64x1xf32>
    %28 = vector.broadcast %27 : vector<64x1xf32> to vector<64x64xf32>
    %29 = arith.addf %26, %28 : vector<64x64xf32>
    %30 = vector.extract_strided_slice %2 {offsets = [0, 0], sizes = [64, 1], strides = [1, 1]} : vector<64x16xf32> to vector<64x1xf32>
    %31 = vector.extract_strided_slice %0 {offsets = [0, 0], sizes = [1, 64], strides = [1, 1]} : vector<4x64xf32> to vector<1x64xf32>
    %32 = vector.broadcast %30 : vector<64x1xf32> to vector<64x64xf32>
    %33 = vector.broadcast %31 : vector<1x64xf32> to vector<64x64xf32>
    %34 = arith.mulf %32, %33 : vector<64x64xf32>
    %35 = arith.addf %29, %34 : vector<64x64xf32>
    %36 = vector.extract_strided_slice %2 {offsets = [0, 1], sizes = [64, 1], strides = [1, 1]} : vector<64x16xf32> to vector<64x1xf32>
    %37 = vector.extract_strided_slice %0 {offsets = [1, 0], sizes = [1, 64], strides = [1, 1]} : vector<4x64xf32> to vector<1x64xf32>
    %38 = vector.broadcast %36 : vector<64x1xf32> to vector<64x64xf32>
    %39 = vector.broadcast %37 : vector<1x64xf32> to vector<64x64xf32>
    %40 = arith.mulf %38, %39 : vector<64x64xf32>
    %41 = arith.addf %35, %40 : vector<64x64xf32>
    %42 = vector.extract_strided_slice %2 {offsets = [0, 2], sizes = [64, 1], strides = [1, 1]} : vector<64x16xf32> to vector<64x1xf32>
    %43 = vector.extract_strided_slice %0 {offsets = [2, 0], sizes = [1, 64], strides = [1, 1]} : vector<4x64xf32> to vector<1x64xf32>
    %44 = vector.broadcast %42 : vector<64x1xf32> to vector<64x64xf32>
    %45 = vector.broadcast %43 : vector<1x64xf32> to vector<64x64xf32>
    %46 = arith.mulf %44, %45 : vector<64x64xf32>
    %47 = arith.addf %41, %46 : vector<64x64xf32>
    %48 = vector.extract_strided_slice %2 {offsets = [0, 3], sizes = [64, 1], strides = [1, 1]} : vector<64x16xf32> to vector<64x1xf32>
    %49 = vector.extract_strided_slice %0 {offsets = [3, 0], sizes = [1, 64], strides = [1, 1]} : vector<4x64xf32> to vector<1x64xf32>
    %50 = vector.broadcast %48 : vector<64x1xf32> to vector<64x64xf32>
    %51 = vector.broadcast %49 : vector<1x64xf32> to vector<64x64xf32>
    %52 = arith.mulf %50, %51 : vector<64x64xf32>
    %53 = arith.addf %47, %52 : vector<64x64xf32>
    %cst_9 = arith.constant 0.000000e+00 : f32
    %54 = vector.broadcast %cst_9 : f32 to vector<64x64xf32>
    %55 = arith.maximumf %53, %54 : vector<64x64xf32>
    %c0_10 = arith.constant 0 : index
    %c0_11 = arith.constant 0 : index
    %c0_12 = arith.constant 0 : index
    %56 = vector.load %arg4[%c0_10, %c0_11, %c0_12] : memref<5x64x64xf32, #tpu.memory_space<vmem>>, vector<1x64x64xf32>
    %57 = vector.shape_cast %56 : vector<1x64x64xf32> to vector<64x64xf32>
    %cst_13 = arith.constant dense<0.000000e+00> : vector<64x64xf32>
    %58 = tpu.matmul %57, %55, %cst_13 {dimension_numbers = #tpu.dot_dimension_numbers<[1], [0], [0], [1], [0, 0, 1, 1], [], []>} : vector<64x64xf32>, vector<64x64xf32>, vector<64x64xf32> -> vector<64x64xf32>
    %59 = vector.extract_strided_slice %2 {offsets = [0, 7], sizes = [64, 1], strides = [1, 1]} : vector<64x16xf32> to vector<64x1xf32>
    %60 = vector.broadcast %59 : vector<64x1xf32> to vector<64x64xf32>
    %61 = arith.addf %58, %60 : vector<64x64xf32>
    %cst_14 = arith.constant 0.000000e+00 : f32
    %62 = vector.broadcast %cst_14 : f32 to vector<64x64xf32>
    %63 = arith.maximumf %61, %62 : vector<64x64xf32>
    %c1_15 = arith.constant 1 : index
    %c0_16 = arith.constant 0 : index
    %c0_17 = arith.constant 0 : index
    %64 = vector.load %arg4[%c1_15, %c0_16, %c0_17] : memref<5x64x64xf32, #tpu.memory_space<vmem>>, vector<1x64x64xf32>
    %65 = vector.shape_cast %64 : vector<1x64x64xf32> to vector<64x64xf32>
    %cst_18 = arith.constant dense<0.000000e+00> : vector<64x64xf32>
    %66 = tpu.matmul %65, %63, %cst_18 {dimension_numbers = #tpu.dot_dimension_numbers<[1], [0], [0], [1], [0, 0, 1, 1], [], []>} : vector<64x64xf32>, vector<64x64xf32>, vector<64x64xf32> -> vector<64x64xf32>
    %67 = vector.extract_strided_slice %2 {offsets = [0, 8], sizes = [64, 1], strides = [1, 1]} : vector<64x16xf32> to vector<64x1xf32>
    %68 = vector.broadcast %67 : vector<64x1xf32> to vector<64x64xf32>
    %69 = arith.addf %66, %68 : vector<64x64xf32>
    %cst_19 = arith.constant 0.000000e+00 : f32
    %70 = vector.broadcast %cst_19 : f32 to vector<64x64xf32>
    %71 = arith.maximumf %69, %70 : vector<64x64xf32>
    %c2_20 = arith.constant 2 : index
    %c0_21 = arith.constant 0 : index
    %c0_22 = arith.constant 0 : index
    %72 = vector.load %arg4[%c2_20, %c0_21, %c0_22] : memref<5x64x64xf32, #tpu.memory_space<vmem>>, vector<1x64x64xf32>
    %73 = vector.shape_cast %72 : vector<1x64x64xf32> to vector<64x64xf32>
    %cst_23 = arith.constant dense<0.000000e+00> : vector<64x64xf32>
    %74 = tpu.matmul %73, %71, %cst_23 {dimension_numbers = #tpu.dot_dimension_numbers<[1], [0], [0], [1], [0, 0, 1, 1], [], []>} : vector<64x64xf32>, vector<64x64xf32>, vector<64x64xf32> -> vector<64x64xf32>
    %75 = vector.extract_strided_slice %2 {offsets = [0, 9], sizes = [64, 1], strides = [1, 1]} : vector<64x16xf32> to vector<64x1xf32>
    %76 = vector.broadcast %75 : vector<64x1xf32> to vector<64x64xf32>
    %77 = arith.addf %74, %76 : vector<64x64xf32>
    %cst_24 = arith.constant 0.000000e+00 : f32
    %78 = vector.broadcast %cst_24 : f32 to vector<64x64xf32>
    %79 = arith.maximumf %77, %78 : vector<64x64xf32>
    %c3_25 = arith.constant 3 : index
    %c0_26 = arith.constant 0 : index
    %c0_27 = arith.constant 0 : index
    %80 = vector.load %arg4[%c3_25, %c0_26, %c0_27] : memref<5x64x64xf32, #tpu.memory_space<vmem>>, vector<1x64x64xf32>
    %81 = vector.shape_cast %80 : vector<1x64x64xf32> to vector<64x64xf32>
    %cst_28 = arith.constant dense<0.000000e+00> : vector<64x64xf32>
    %82 = tpu.matmul %81, %79, %cst_28 {dimension_numbers = #tpu.dot_dimension_numbers<[1], [0], [0], [1], [0, 0, 1, 1], [], []>} : vector<64x64xf32>, vector<64x64xf32>, vector<64x64xf32> -> vector<64x64xf32>
    %83 = vector.extract_strided_slice %2 {offsets = [0, 5], sizes = [64, 1], strides = [1, 1]} : vector<64x16xf32> to vector<64x1xf32>
    %84 = vector.broadcast %83 : vector<64x1xf32> to vector<64x64xf32>
    %85 = vector.broadcast %22 : vector<1x64xf32> to vector<64x64xf32>
    %86 = arith.mulf %84, %85 : vector<64x64xf32>
    %87 = arith.addf %82, %86 : vector<64x64xf32>
    %88 = vector.extract_strided_slice %2 {offsets = [0, 10], sizes = [64, 1], strides = [1, 1]} : vector<64x16xf32> to vector<64x1xf32>
    %89 = vector.broadcast %88 : vector<64x1xf32> to vector<64x64xf32>
    %90 = arith.addf %87, %89 : vector<64x64xf32>
    %cst_29 = arith.constant 0.000000e+00 : f32
    %91 = vector.broadcast %cst_29 : f32 to vector<64x64xf32>
    %92 = arith.maximumf %90, %91 : vector<64x64xf32>
    %c4 = arith.constant 4 : index
    %c0_30 = arith.constant 0 : index
    %c0_31 = arith.constant 0 : index
    %93 = vector.load %arg4[%c4, %c0_30, %c0_31] : memref<5x64x64xf32, #tpu.memory_space<vmem>>, vector<1x64x64xf32>
    %94 = vector.shape_cast %93 : vector<1x64x64xf32> to vector<64x64xf32>
    %cst_32 = arith.constant dense<0.000000e+00> : vector<64x64xf32>
    %95 = tpu.matmul %94, %92, %cst_32 {dimension_numbers = #tpu.dot_dimension_numbers<[1], [0], [0], [1], [0, 0, 1, 1], [], []>} : vector<64x64xf32>, vector<64x64xf32>, vector<64x64xf32> -> vector<64x64xf32>
    %96 = vector.extract_strided_slice %2 {offsets = [0, 11], sizes = [64, 1], strides = [1, 1]} : vector<64x16xf32> to vector<64x1xf32>
    %97 = vector.broadcast %96 : vector<64x1xf32> to vector<64x64xf32>
    %98 = arith.addf %95, %97 : vector<64x64xf32>
    %99 = math.tanh %98 : vector<64x64xf32>
    %c0_33 = arith.constant 0 : index
    %c0_34 = arith.constant 0 : index
    %100 = vector.load %arg6[%c0_33, %c0_34] : memref<8x64xf32, #tpu.memory_space<vmem>>, vector<8x64xf32>
    %cst_35 = arith.constant dense<0.000000e+00> : vector<8x64xf32>
    %101 = tpu.matmul %100, %99, %cst_35 {dimension_numbers = #tpu.dot_dimension_numbers<[1], [0], [0], [1], [0, 0, 1, 1], [], []>} : vector<8x64xf32>, vector<64x64xf32>, vector<8x64xf32> -> vector<8x64xf32>
    %102 = vector.extract_strided_slice %2 {offsets = [0, 12], sizes = [8, 1], strides = [1, 1]} : vector<64x16xf32> to vector<8x1xf32>
    %103 = vector.broadcast %102 : vector<8x1xf32> to vector<8x64xf32>
    %104 = arith.addf %101, %103 : vector<8x64xf32>
    %105 = vector.extract_strided_slice %104 {offsets = [0, 0], sizes = [4, 64], strides = [1, 1]} : vector<8x64xf32> to vector<4x64xf32>
    %c0_36 = arith.constant 0 : index
    %c0_37 = arith.constant 0 : index
    %106 = vector.load %arg7[%c0_36, %c0_37] : memref<4x64xf32, #tpu.memory_space<vmem>>, vector<4x64xf32>
    tpu.vector_store %arg7[%c0_36, %c0_37], %105 {strides = array<i32>} : memref<4x64xf32, #tpu.memory_space<vmem>>, vector<4x64xf32>,
    return
  }
  func.func @transform_0(%arg0: i32) -> i32 {
    %c0_i32 = arith.constant 0 : i32
    %c0_i32_0 = arith.constant 0 : i32
    return %c0_i32 : i32
  }
  func.func @transform_1(%arg0: i32) -> (i32, i32) {
    %c0_i32 = arith.constant 0 : i32
    %c0_i32_0 = arith.constant 0 : i32
    return %c0_i32, %arg0 : i32, i32
  }
  func.func @transform_2(%arg0: i32) -> (i32, i32) {
    %c0_i32 = arith.constant 0 : i32
    %c0_i32_0 = arith.constant 0 : i32
    return %c0_i32, %arg0 : i32, i32
  }
  func.func @transform_3(%arg0: i32) -> (i32, i32, i32) {
    %c0_i32 = arith.constant 0 : i32
    %c0_i32_0 = arith.constant 0 : i32
    %c0_i32_1 = arith.constant 0 : i32
    %c0_i32_2 = arith.constant 0 : i32
    return %c0_i32, %c0_i32_0, %c0_i32_1 : i32, i32, i32
  }
  func.func @transform_4(%arg0: i32) -> (i32, i32) {
    %c0_i32 = arith.constant 0 : i32
    %c0_i32_0 = arith.constant 0 : i32
    %c0_i32_1 = arith.constant 0 : i32
    return %c0_i32, %c0_i32_0 : i32, i32
  }
  func.func @transform_5(%arg0: i32) -> (i32, i32) {
    %c0_i32 = arith.constant 0 : i32
    %c0_i32_0 = arith.constant 0 : i32
    %c0_i32_1 = arith.constant 0 : i32
    return %c0_i32, %c0_i32_0 : i32, i32
  }
  func.func @transform_6(%arg0: i32) -> (i32, i32) {
    %c0_i32 = arith.constant 0 : i32
    %c0_i32_0 = arith.constant 0 : i32
    return %c0_i32, %arg0 : i32, i32
  }
}

</mosaic_0001>

<llo_original>
// kernel: noise_model_forward.1
$region0: #{noise_model_forward.1}
  #allocation0 [shape = 'u32[]', space=smem, size = 0x4, offset = 0x4, fixed_abs, tag = 'smem constant byte address 0x4 - core index']
  #allocation1 [shape = 'u32[72,128]{1,0:T(1,128)}', space=vmem, size = 0x9000, scoped, tag = 'internal scratch']
  %s0 = inlined_call_operand.vmem [shape: f32[4], index: 0, kind: input, shape index: {}]
  %s1 = inlined_call_operand.vmem [shape: f32[4,64], index: 1, kind: input, shape index: {}]
  %s2 = inlined_call_operand.vmem [shape: f32[1,64], index: 2, kind: input, shape index: {}]
  %s3 = inlined_call_operand.hbm [shape: f32[5,64,64], index: 3, kind: input, shape index: {}]
  %s4 = inlined_call_operand.vmem [shape: f32[64,16], index: 4, kind: input, shape index: {}]
  %s5 = inlined_call_operand.vmem [shape: f32[8,64], index: 5, kind: input, shape index: {}]
  %s6 = inlined_call_operand.hbm [shape: f32[4,64], index: 6, kind: output, shape index: {}]
  %s7 = sld [smem:[#allocation0]]
  $region42: #{noise_model_forward.1} parent=0
    _
  %s9 = ssub.s32 1, %s7
  %s10 = scalar_select 0, %s9, %s7
  $region1: #{noise_model_forward.1} parent=0
    #allocation2 [shape = 'u8[512]{0}', space=smem, size = 0x200, scoped, tag = 'input window, operand 0, single buffered']
    #allocation3 [shape = 's32[1]{0}', space=sflag, size = 0x4, scoped, tag = 'scoped memory for noise_model_forward.1']
    #allocation4 [shape = 's32[1]{0}', space=sflag, size = 0x4, scoped, tag = 'scoped memory for noise_model_forward.1']
    #allocation5 [shape = 's32[1]{0}', space=sflag, size = 0x4, scoped, tag = 'scoped memory for noise_model_forward.1']
    #allocation6 [shape = 'u8[163840]{0}', space=vmem, size = 0x28000, scoped, tag = 'input window, operand 3, single buffered']
    #allocation7 [shape = 'u8[2048]{0}', space=vmem, size = 0x800, scoped, tag = 'output window, operand 0, single buffered']
    %11 = vsyncpa [#allocation5], 0
    %12 = vsyncpa [#allocation3], 0
    %13 = vsyncpa [#allocation4], 0
    // Predicated region
    $region2: #{noise_model_forward.1} parent=1 // pred_check
      _
    $region3: #{noise_model_forward.1} parent=1 // pred_check_branch
      %15 = sbr.rel (0) target = $region5
    $region4: #{noise_model_forward.1} parent=1 // pred_region
      %17 = vsyncadd [#allocation5], 0
      %s19 = sshll.u32 %s0, 4
      %s20 = int_to_ptr.vmem [resolvable:$true] %s19
      %22 = dma.vmem_to_smem %s20, 16, [#allocation2], [#allocation5]
    $region5: #{noise_model_forward.1} parent=1 // pred_fallthru
      _
    // Predicated region
    $region6: #{noise_model_forward.1} parent=1 // pred_check
      _
    $region7: #{noise_model_forward.1} parent=1 // pred_check_branch
      %24 = sbr.rel (0) target = $region9
    $region8: #{noise_model_forward.1} parent=1 // pred_region
      _
    $region9: #{noise_model_forward.1} parent=1 // pred_fallthru
      _
    // Predicated region
    $region10: #{noise_model_forward.1} parent=1 // pred_check
      _
    $region11: #{noise_model_forward.1} parent=1 // pred_check_branch
      %26 = sbr.rel (0) target = $region13
    $region12: #{noise_model_forward.1} parent=1 // pred_region
      _
    $region13: #{noise_model_forward.1} parent=1 // pred_fallthru
      _
    // Predicated region
    $region14: #{noise_model_forward.1} parent=1 // pred_check
      _
    $region15: #{noise_model_forward.1} parent=1 // pred_check_branch
      %28 = sbr.rel (0) target = $region17
    $region16: #{noise_model_forward.1} parent=1 // pred_region
      %30 = vsyncadd [#allocation3], 0
      %s31 = sshll.u32 %s3, 4
      %s32 = int_to_ptr.hbm [resolvable:$true] %s31
      %s33 = sshll.u32 [#allocation6], 4
      %s34 = int_to_ptr.vmem [resolvable:$true] %s33
      %39 = dma.hbm_to_vmem [thread:$0]  %s32, 5120, %s34, [#allocation3], 128, 128, 8
    $region17: #{noise_model_forward.1} parent=1 // pred_fallthru
      _
    // Predicated region
    $region18: #{noise_model_forward.1} parent=1 // pred_check
      _
    $region19: #{noise_model_forward.1} parent=1 // pred_check_branch
      %41 = sbr.rel (0) target = $region21
    $region20: #{noise_model_forward.1} parent=1 // pred_region
      _
    $region21: #{noise_model_forward.1} parent=1 // pred_fallthru
      _
    // Predicated region
    $region22: #{noise_model_forward.1} parent=1 // pred_check
      _
    $region23: #{noise_model_forward.1} parent=1 // pred_check_branch
      %43 = sbr.rel (0) target = $region25
    $region24: #{noise_model_forward.1} parent=1 // pred_region
      _
    $region25: #{noise_model_forward.1} parent=1 // pred_fallthru
      _
    // Predicated region
    $region26: #{noise_model_forward.1} parent=1 // pred_check
      _
    $region27: #{noise_model_forward.1} parent=1 // pred_check_branch
      %45 = sbr.rel (0) target = $region29
    $region28: #{noise_model_forward.1} parent=1 // pred_region
      %47 = dma.done [#allocation5], 16
    $region29: #{noise_model_forward.1} parent=1 // pred_fallthru
      _
    // Predicated region
    $region30: #{noise_model_forward.1} parent=1 // pred_check
      _
    $region31: #{noise_model_forward.1} parent=1 // pred_check_branch
      %49 = sbr.rel (0) target = $region33
    $region32: #{noise_model_forward.1} parent=1 // pred_region
      %51 = dma.done [#allocation3], 5120
    $region33: #{noise_model_forward.1} parent=1 // pred_fallthru
      _
    %52 = sfence
    %v53 = vld [vmem:[%s1] sm:$0xf]
    %v54 = vld [vmem:[%s2] sm:$0x1]
    %v55 = vld [vmem:[%s4] sm:$0xff]
    %v56 = vld [vmem:[%s4 + $0x8] sm:$0xff]
    %v57 = vld [vmem:[%s4 + $0x10] sm:$0xff]
    %v58 = vld [vmem:[%s4 + $0x18] sm:$0xff]
    %v59 = vld [vmem:[%s4 + $0x20] sm:$0xff]
    %v60 = vld [vmem:[%s4 + $0x28] sm:$0xff]
    %v61 = vld [vmem:[%s4 + $0x30] sm:$0xff]
    %v62 = vld [vmem:[%s4 + $0x38] sm:$0xff]
    %v63 = vrcp.pop 100.0
    %v64 = vmul.f32 100.0, %v63
    %v65 = vsub.f32 1.0, %v64
    %v66 = vmul.f32 %v63, %v65
    %v67 = vadd.f32 %v63, %v66
    %vm68 = vweird.f32 %v63
    %v69 = vsel %vm68, %v63, %v67
    %v70 = vmul.f32 %v54, %v69
    %v71 = vsub.f32 %v70, 0.5
    %s72 = sld [smem:[#allocation2]]
    %v73 = vstv %s72
    %v74 = vmul.f32 %v71, %v73
    %s75 = sld [smem:[#allocation2 + $0x1]]
    %v76 = vstv %s75
    %v77 = vadd.f32 %v74, %v76
    %v78 = vmax.f32 %v77, 0.0
    %s79 = sld [smem:[#allocation2 + $0x2]]
    %v80 = vstv %s79
    %v81 = vmul.f32 %v78, %v80
    %s82 = sld [smem:[#allocation2 + $0x3]]
    %v83 = vstv %s82
    %v84 = vadd.f32 %v81, %v83
    %v85 = vmax.f32 %v84, 0.0
    %87 = vset.pattern.permute.xlu0 4
    %88 = vperm.xlu0 %87, %v55
    %v89 = vpop.permute.xlu0 %88
    %92 = vset.pattern.permute.xlu0 4
    %93 = vperm.xlu0 %92, %v56
    %v94 = vpop.permute.xlu0 %93
    %97 = vset.pattern.permute.xlu0 4
    %98 = vperm.xlu0 %97, %v57
    %v99 = vpop.permute.xlu0 %98
    %102 = vset.pattern.permute.xlu0 4
    %103 = vperm.xlu0 %102, %v58
    %v104 = vpop.permute.xlu0 %103
    %107 = vset.pattern.permute.xlu0 4
    %108 = vperm.xlu0 %107, %v59
    %v109 = vpop.permute.xlu0 %108
    %112 = vset.pattern.permute.xlu0 4
    %113 = vperm.xlu0 %112, %v60
    %v114 = vpop.permute.xlu0 %113
    %117 = vset.pattern.permute.xlu0 4
    %118 = vperm.xlu0 %117, %v61
    %v119 = vpop.permute.xlu0 %118
    %122 = vset.pattern.permute.xlu0 4
    %123 = vperm.xlu0 %122, %v62
    %v124 = vpop.permute.xlu0 %123
    %v127 = vperm.slane %v85, 0
    %v129 = vmul.f32 %v89, %v127
    %v130 = vmul.f32 %v94, %v127
    %v131 = vmul.f32 %v99, %v127
    %v132 = vmul.f32 %v104, %v127
    %v133 = vmul.f32 %v109, %v127
    %v134 = vmul.f32 %v114, %v127
    %v135 = vmul.f32 %v119, %v127
    %v136 = vmul.f32 %v124, %v127
    %137 = vset.pattern.permute.xlu0 6
    %138 = vperm.xlu0 %137, %v55
    %v139 = vpop.permute.xlu0 %138
    %141 = vset.pattern.permute.xlu0 6
    %142 = vperm.xlu0 %141, %v56
    %v143 = vpop.permute.xlu0 %142
    %145 = vset.pattern.permute.xlu0 6
    %146 = vperm.xlu0 %145, %v57
    %v147 = vpop.permute.xlu0 %146
    %149 = vset.pattern.permute.xlu0 6
    %150 = vperm.xlu0 %149, %v58
    %v151 = vpop.permute.xlu0 %150
    %153 = vset.pattern.permute.xlu0 6
    %154 = vperm.xlu0 %153, %v59
    %v155 = vpop.permute.xlu0 %154
    %157 = vset.pattern.permute.xlu0 6
    %158 = vperm.xlu0 %157, %v60
    %v159 = vpop.permute.xlu0 %158
    %161 = vset.pattern.permute.xlu0 6
    %162 = vperm.xlu0 %161, %v61
    %v163 = vpop.permute.xlu0 %162
    %165 = vset.pattern.permute.xlu0 6
    %166 = vperm.xlu0 %165, %v62
    %v167 = vpop.permute.xlu0 %166
    %v169 = vadd.f32 %v129, %v139
    %v170 = vadd.f32 %v130, %v143
    %v171 = vadd.f32 %v131, %v147
    %v172 = vadd.f32 %v132, %v151
    %v173 = vadd.f32 %v133, %v155
    %v174 = vadd.f32 %v134, %v159
    %v175 = vadd.f32 %v135, %v163
    %v176 = vadd.f32 %v136, %v167
    %177 = vset.pattern.permute.xlu0 0
    %178 = vperm.xlu0 %177, %v55
    %v179 = vpop.permute.xlu0 %178
    %181 = vset.pattern.permute.xlu0 0
    %182 = vperm.xlu0 %181, %v56
    %v183 = vpop.permute.xlu0 %182
    %185 = vset.pattern.permute.xlu0 0
    %186 = vperm.xlu0 %185, %v57
    %v187 = vpop.permute.xlu0 %186
    %189 = vset.pattern.permute.xlu0 0
    %190 = vperm.xlu0 %189, %v58
    %v191 = vpop.permute.xlu0 %190
    %193 = vset.pattern.permute.xlu0 0
    %194 = vperm.xlu0 %193, %v59
    %v195 = vpop.permute.xlu0 %194
    %197 = vset.pattern.permute.xlu0 0
    %198 = vperm.xlu0 %197, %v60
    %v199 = vpop.permute.xlu0 %198
    %201 = vset.pattern.permute.xlu0 0
    %202 = vperm.xlu0 %201, %v61
    %v203 = vpop.permute.xlu0 %202
    %205 = vset.pattern.permute.xlu0 0
    %206 = vperm.xlu0 %205, %v62
    %v207 = vpop.permute.xlu0 %206
    %v209 = vperm.slane %v53, 0
    %v210 = vmul.f32 %v179, %v209
    %v211 = vmul.f32 %v183, %v209
    %v212 = vmul.f32 %v187, %v209
    %v213 = vmul.f32 %v191, %v209
    %v214 = vmul.f32 %v195, %v209
    %v215 = vmul.f32 %v199, %v209
    %v216 = vmul.f32 %v203, %v209
    %v217 = vmul.f32 %v207, %v209
    %v218 = vadd.f32 %v169, %v210
    %v219 = vadd.f32 %v170, %v211
    %v220 = vadd.f32 %v171, %v212
    %v221 = vadd.f32 %v172, %v213
    %v222 = vadd.f32 %v173, %v214
    %v223 = vadd.f32 %v174, %v215
    %v224 = vadd.f32 %v175, %v216
    %v225 = vadd.f32 %v176, %v217
    %226 = vset.pattern.permute.xlu0 1
    %227 = vperm.xlu0 %226, %v55
    %v228 = vpop.permute.xlu0 %227
    %230 = vset.pattern.permute.xlu0 1
    %231 = vperm.xlu0 %230, %v56
    %v232 = vpop.permute.xlu0 %231
    %234 = vset.pattern.permute.xlu0 1
    %235 = vperm.xlu0 %234, %v57
    %v236 = vpop.permute.xlu0 %235
    %238 = vset.pattern.permute.xlu0 1
    %239 = vperm.xlu0 %238, %v58
    %v240 = vpop.permute.xlu0 %239
    %242 = vset.pattern.permute.xlu0 1
    %243 = vperm.xlu0 %242, %v59
    %v244 = vpop.permute.xlu0 %243
    %246 = vset.pattern.permute.xlu0 1
    %247 = vperm.xlu0 %246, %v60
    %v248 = vpop.permute.xlu0 %247
    %250 = vset.pattern.permute.xlu0 1
    %251 = vperm.xlu0 %250, %v61
    %v252 = vpop.permute.xlu0 %251
    %254 = vset.pattern.permute.xlu0 1
    %255 = vperm.xlu0 %254, %v62
    %v256 = vpop.permute.xlu0 %255
    %v258 = vperm.slane %v53, 1
    %v259 = vmul.f32 %v228, %v258
    %v260 = vmul.f32 %v232, %v258
    %v261 = vmul.f32 %v236, %v258
    %v262 = vmul.f32 %v240, %v258
    %v263 = vmul.f32 %v244, %v258
    %v264 = vmul.f32 %v248, %v258
    %v265 = vmul.f32 %v252, %v258
    %v266 = vmul.f32 %v256, %v258
    %v267 = vadd.f32 %v218, %v259
    %v268 = vadd.f32 %v219, %v260
    %v269 = vadd.f32 %v220, %v261
    %v270 = vadd.f32 %v221, %v262
    %v271 = vadd.f32 %v222, %v263
    %v272 = vadd.f32 %v223, %v264
    %v273 = vadd.f32 %v224, %v265
    %v274 = vadd.f32 %v225, %v266
    %275 = vset.pattern.permute.xlu0 2
    %276 = vperm.xlu0 %275, %v55
    %v277 = vpop.permute.xlu0 %276
    %279 = vset.pattern.permute.xlu0 2
    %280 = vperm.xlu0 %279, %v56
    %v281 = vpop.permute.xlu0 %280
    %283 = vset.pattern.permute.xlu0 2
    %284 = vperm.xlu0 %283, %v57
    %v285 = vpop.permute.xlu0 %284
    %287 = vset.pattern.permute.xlu0 2
    %288 = vperm.xlu0 %287, %v58
    %v289 = vpop.permute.xlu0 %288
    %291 = vset.pattern.permute.xlu0 2
    %292 = vperm.xlu0 %291, %v59
    %v293 = vpop.permute.xlu0 %292
    %295 = vset.pattern.permute.xlu0 2
    %296 = vperm.xlu0 %295, %v60
    %v297 = vpop.permute.xlu0 %296
    %299 = vset.pattern.permute.xlu0 2
    %300 = vperm.xlu0 %299, %v61
    %v301 = vpop.permute.xlu0 %300
    %303 = vset.pattern.permute.xlu0 2
    %304 = vperm.xlu0 %303, %v62
    %v305 = vpop.permute.xlu0 %304
    %v307 = vperm.slane %v53, 2
    %v308 = vmul.f32 %v277, %v307
    %v309 = vmul.f32 %v281, %v307
    %v310 = vmul.f32 %v285, %v307
    %v311 = vmul.f32 %v289, %v307
    %v312 = vmul.f32 %v293, %v307
    %v313 = vmul.f32 %v297, %v307
    %v314 = vmul.f32 %v301, %v307
    %v315 = vmul.f32 %v305, %v307
    %v316 = vadd.f32 %v267, %v308
    %v317 = vadd.f32 %v268, %v309
    %v318 = vadd.f32 %v269, %v310
    %v319 = vadd.f32 %v270, %v311
    %v320 = vadd.f32 %v271, %v312
    %v321 = vadd.f32 %v272, %v313
    %v322 = vadd.f32 %v273, %v314
    %v323 = vadd.f32 %v274, %v315
    %324 = vset.pattern.permute.xlu0 3
    %325 = vperm.xlu0 %324, %v55
    %v326 = vpop.permute.xlu0 %325
    %328 = vset.pattern.permute.xlu0 3
    %329 = vperm.xlu0 %328, %v56
    %v330 = vpop.permute.xlu0 %329
    %332 = vset.pattern.permute.xlu0 3
    %333 = vperm.xlu0 %332, %v57
    %v334 = vpop.permute.xlu0 %333
    %336 = vset.pattern.permute.xlu0 3
    %337 = vperm.xlu0 %336, %v58
    %v338 = vpop.permute.xlu0 %337
    %340 = vset.pattern.permute.xlu0 3
    %341 = vperm.xlu0 %340, %v59
    %v342 = vpop.permute.xlu0 %341
    %344 = vset.pattern.permute.xlu0 3
    %345 = vperm.xlu0 %344, %v60
    %v346 = vpop.permute.xlu0 %345
    %348 = vset.pattern.permute.xlu0 3
    %349 = vperm.xlu0 %348, %v61
    %v350 = vpop.permute.xlu0 %349
    %352 = vset.pattern.permute.xlu0 3
    %353 = vperm.xlu0 %352, %v62
    %v354 = vpop.permute.xlu0 %353
    %v356 = vperm.slane %v53, 3
    %v357 = vmul.f32 %v326, %v356
    %v358 = vmul.f32 %v330, %v356
    %v359 = vmul.f32 %v334, %v356
    %v360 = vmul.f32 %v338, %v356
    %v361 = vmul.f32 %v342, %v356
    %v362 = vmul.f32 %v346, %v356
    %v363 = vmul.f32 %v350, %v356
    %v364 = vmul.f32 %v354, %v356
    %v365 = vadd.f32 %v316, %v357
    %v366 = vadd.f32 %v317, %v358
    %v367 = vadd.f32 %v318, %v359
    %v368 = vadd.f32 %v319, %v360
    %v369 = vadd.f32 %v320, %v361
    %v370 = vadd.f32 %v321, %v362
    %v371 = vadd.f32 %v322, %v363
    %v372 = vadd.f32 %v323, %v364
    %v373 = vmax.f32 %v365, 0.0
    %v374 = vmax.f32 %v366, 0.0
    %v375 = vmax.f32 %v367, 0.0
    %v376 = vmax.f32 %v368, 0.0
    %v377 = vmax.f32 %v369, 0.0
    %v378 = vmax.f32 %v370, 0.0
    %v379 = vmax.f32 %v371, 0.0
    %v380 = vmax.f32 %v372, 0.0
    %v381 = vld [vmem:[#allocation6] sm:$0xff]
    %v382 = vld [vmem:[#allocation6 + $0x8] sm:$0xff]
    %v383 = vld [vmem:[#allocation6 + $0x10] sm:$0xff]
    %v384 = vld [vmem:[#allocation6 + $0x18] sm:$0xff]
    %v385 = vld [vmem:[#allocation6 + $0x20] sm:$0xff]
    %v386 = vld [vmem:[#allocation6 + $0x28] sm:$0xff]
    %v387 = vld [vmem:[#allocation6 + $0x30] sm:$0xff]
    %v388 = vld [vmem:[#allocation6 + $0x38] sm:$0xff]
    %389 = vset.pattern.permute.xlu0 7
    %390 = vperm.xlu0 %389, %v55
    %v391 = vpop.permute.xlu0 %390
    %393 = vset.pattern.permute.xlu0 7
    %394 = vperm.xlu0 %393, %v56
    %v395 = vpop.permute.xlu0 %394
    %397 = vset.pattern.permute.xlu0 7
    %398 = vperm.xlu0 %397, %v57
    %v399 = vpop.permute.xlu0 %398
    %401 = vset.pattern.permute.xlu0 7
    %402 = vperm.xlu0 %401, %v58
    %v403 = vpop.permute.xlu0 %402
    %405 = vset.pattern.permute.xlu0 7
    %406 = vperm.xlu0 %405, %v59
    %v407 = vpop.permute.xlu0 %406
    %409 = vset.pattern.permute.xlu0 7
    %410 = vperm.xlu0 %409, %v60
    %v411 = vpop.permute.xlu0 %410
    %413 = vset.pattern.permute.xlu0 7
    %414 = vperm.xlu0 %413, %v61
    %v415 = vpop.permute.xlu0 %414
    %417 = vset.pattern.permute.xlu0 7
    %418 = vperm.xlu0 %417, %v62
    %v419 = vpop.permute.xlu0 %418
    %vm421 = vcmask 523264
    %v423 = vsel %vm421, %v381, 0
    %v426 = vsel %vm421, %v382, 0
    %v429 = vsel %vm421, %v383, 0
    %v432 = vsel %vm421, %v384, 0
    %v435 = vsel %vm421, %v385, 0
    %v438 = vsel %vm421, %v386, 0
    %v441 = vsel %vm421, %v387, 0
    %v444 = vsel %vm421, %v388, 0
    %446 = vmatpush.msra.mxu0 0.0
    %447 = vmatpush.msra.mxu0 0.0
    %448 = vmatpush.msra.mxu0 0.0
    %449 = vmatpush.msra.mxu0 0.0
    %450 = vmatpush.msra.mxu0 0.0
    %451 = vmatpush.msra.mxu0 0.0
    %452 = vmatpush.msra.mxu0 0.0
    %453 = vmatpush.msra.mxu0 0.0
    %454 = vmatpush.msra.mxu0 %v380
    %455 = vmatpush.msra.mxu0 %v379
    %456 = vmatpush.msra.mxu0 %v378
    %457 = vmatpush.msra.mxu0 %v377
    %458 = vmatpush.msra.mxu0 %v376
    %459 = vmatpush.msra.mxu0 %v375
    %460 = vmatpush.msra.mxu0 %v374
    %461 = vmatpush.msra.mxu0 %v373
    %462 = vmatmul.f32.gmra.mxu0 %v423
    %v463 = vpop.f32.mrf.mxu0
    %v464 = vadd.f32 %v391, %v463
    %465 = vmatmul.f32.gmra.mxu0 %v426
    %v466 = vpop.f32.mrf.mxu0
    %v467 = vadd.f32 %v395, %v466
    %468 = vmatmul.f32.gmra.mxu0 %v429
    %v469 = vpop.f32.mrf.mxu0
    %v470 = vadd.f32 %v399, %v469
    %471 = vmatmul.f32.gmra.mxu0 %v432
    %v472 = vpop.f32.mrf.mxu0
    %v473 = vadd.f32 %v403, %v472
    %474 = vmatmul.f32.gmra.mxu0 %v435
    %v475 = vpop.f32.mrf.mxu0
    %v476 = vadd.f32 %v407, %v475
    %477 = vmatmul.f32.gmra.mxu0 %v438
    %v478 = vpop.f32.mrf.mxu0
    %v479 = vadd.f32 %v411, %v478
    %480 = vmatmul.f32.gmra.mxu0 %v441
    %v481 = vpop.f32.mrf.mxu0
    %v482 = vadd.f32 %v415, %v481
    %483 = vmatmul.f32.gmra.mxu0 %v444
    %v484 = vpop.f32.mrf.mxu0
    %v485 = vadd.f32 %v419, %v484
    %486 = vdwg.mxu0
    %v487 = vmax.f32 %v464, 0.0
    %v488 = vmax.f32 %v467, 0.0
    %v489 = vmax.f32 %v470, 0.0
    %v490 = vmax.f32 %v473, 0.0
    %v491 = vmax.f32 %v476, 0.0
    %v492 = vmax.f32 %v479, 0.0
    %v493 = vmax.f32 %v482, 0.0
    %v494 = vmax.f32 %v485, 0.0
    %s495 = scalar_lea.vmem [#allocation6], 64
    %v496 = vld [vmem:[%s495] sm:$0xff]
    %v497 = vld [vmem:[%s495 + $0x8] sm:$0xff]
    %v498 = vld [vmem:[%s495 + $0x10] sm:$0xff]
    %v499 = vld [vmem:[%s495 + $0x18] sm:$0xff]
    %v500 = vld [vmem:[%s495 + $0x20] sm:$0xff]
    %v501 = vld [vmem:[%s495 + $0x28] sm:$0xff]
    %v502 = vld [vmem:[%s495 + $0x30] sm:$0xff]
    %v503 = vld [vmem:[%s495 + $0x38] sm:$0xff]
    %504 = vset.pattern.permute.xlu0 8
    %505 = vperm.xlu0 %504, %v55
    %v506 = vpop.permute.xlu0 %505
    %508 = vset.pattern.permute.xlu0 8
    %509 = vperm.xlu0 %508, %v56
    %v510 = vpop.permute.xlu0 %509
    %512 = vset.pattern.permute.xlu0 8
    %513 = vperm.xlu0 %512, %v57
    %v514 = vpop.permute.xlu0 %513
    %516 = vset.pattern.permute.xlu0 8
    %517 = vperm.xlu0 %516, %v58
    %v518 = vpop.permute.xlu0 %517
    %520 = vset.pattern.permute.xlu0 8
    %521 = vperm.xlu0 %520, %v59
    %v522 = vpop.permute.xlu0 %521
    %524 = vset.pattern.permute.xlu0 8
    %525 = vperm.xlu0 %524, %v60
    %v526 = vpop.permute.xlu0 %525
    %528 = vset.pattern.permute.xlu0 8
    %529 = vperm.xlu0 %528, %v61
    %v530 = vpop.permute.xlu0 %529
    %532 = vset.pattern.permute.xlu0 8
    %533 = vperm.xlu0 %532, %v62
    %v534 = vpop.permute.xlu0 %533
    %v537 = vsel %vm421, %v496, 0
    %v540 = vsel %vm421, %v497, 0
    %v543 = vsel %vm421, %v498, 0
    %v546 = vsel %vm421, %v499, 0
    %v549 = vsel %vm421, %v500, 0
    %v552 = vsel %vm421, %v501, 0
    %v555 = vsel %vm421, %v502, 0
    %v558 = vsel %vm421, %v503, 0
    %560 = vmatpush.msra.mxu0 0.0
    %561 = vmatpush.msra.mxu0 0.0
    %562 = vmatpush.msra.mxu0 0.0
    %563 = vmatpush.msra.mxu0 0.0
    %564 = vmatpush.msra.mxu0 0.0
    %565 = vmatpush.msra.mxu0 0.0
    %566 = vmatpush.msra.mxu0 0.0
    %567 = vmatpush.msra.mxu0 0.0
    %568 = vmatpush.msra.mxu0 %v494
    %569 = vmatpush.msra.mxu0 %v493
    %570 = vmatpush.msra.mxu0 %v492
    %571 = vmatpush.msra.mxu0 %v491
    %572 = vmatpush.msra.mxu0 %v490
    %573 = vmatpush.msra.mxu0 %v489
    %574 = vmatpush.msra.mxu0 %v488
    %575 = vmatpush.msra.mxu0 %v487
    %576 = vmatmul.f32.gmra.mxu0 %v537
    %v577 = vpop.f32.mrf.mxu0
    %v578 = vadd.f32 %v506, %v577
    %579 = vmatmul.f32.gmra.mxu0 %v540
    %v580 = vpop.f32.mrf.mxu0
    %v581 = vadd.f32 %v510, %v580
    %582 = vmatmul.f32.gmra.mxu0 %v543
    %v583 = vpop.f32.mrf.mxu0
    %v584 = vadd.f32 %v514, %v583
    %585 = vmatmul.f32.gmra.mxu0 %v546
    %v586 = vpop.f32.mrf.mxu0
    %v587 = vadd.f32 %v518, %v586
    %588 = vmatmul.f32.gmra.mxu0 %v549
    %v589 = vpop.f32.mrf.mxu0
    %v590 = vadd.f32 %v522, %v589
    %591 = vmatmul.f32.gmra.mxu0 %v552
    %v592 = vpop.f32.mrf.mxu0
    %v593 = vadd.f32 %v526, %v592
    %594 = vmatmul.f32.gmra.mxu0 %v555
    %v595 = vpop.f32.mrf.mxu0
    %v596 = vadd.f32 %v530, %v595
    %597 = vmatmul.f32.gmra.mxu0 %v558
    %v598 = vpop.f32.mrf.mxu0
    %v599 = vadd.f32 %v534, %v598
    %600 = vdwg.mxu0
    %v601 = vmax.f32 %v578, 0.0
    %v602 = vmax.f32 %v581, 0.0
    %v603 = vmax.f32 %v584, 0.0
    %v604 = vmax.f32 %v587, 0.0
    %v605 = vmax.f32 %v590, 0.0
    %v606 = vmax.f32 %v593, 0.0
    %v607 = vmax.f32 %v596, 0.0
    %v608 = vmax.f32 %v599, 0.0
    %s609 = scalar_lea.vmem [#allocation6], 128
    %v610 = vld [vmem:[%s609] sm:$0xff]
    %v611 = vld [vmem:[%s609 + $0x8] sm:$0xff]
    %v612 = vld [vmem:[%s609 + $0x10] sm:$0xff]
    %v613 = vld [vmem:[%s609 + $0x18] sm:$0xff]
    %v614 = vld [vmem:[%s609 + $0x20] sm:$0xff]
    %v615 = vld [vmem:[%s609 + $0x28] sm:$0xff]
    %v616 = vld [vmem:[%s609 + $0x30] sm:$0xff]
    %v617 = vld [vmem:[%s609 + $0x38] sm:$0xff]
    %618 = vset.pattern.permute.xlu0 9
    %619 = vperm.xlu0 %618, %v55
    %v620 = vpop.permute.xlu0 %619
    %622 = vset.pattern.permute.xlu0 9
    %623 = vperm.xlu0 %622, %v56
    %v624 = vpop.permute.xlu0 %623
    %626 = vset.pattern.permute.xlu0 9
    %627 = vperm.xlu0 %626, %v57
    %v628 = vpop.permute.xlu0 %627
    %630 = vset.pattern.permute.xlu0 9
    %631 = vperm.xlu0 %630, %v58
    %v632 = vpop.permute.xlu0 %631
    %634 = vset.pattern.permute.xlu0 9
    %635 = vperm.xlu0 %634, %v59
    %v636 = vpop.permute.xlu0 %635
    %638 = vset.pattern.permute.xlu0 9
    %639 = vperm.xlu0 %638, %v60
    %v640 = vpop.permute.xlu0 %639
    %642 = vset.pattern.permute.xlu0 9
    %643 = vperm.xlu0 %642, %v61
    %v644 = vpop.permute.xlu0 %643
    %646 = vset.pattern.permute.xlu0 9
    %647 = vperm.xlu0 %646, %v62
    %v648 = vpop.permute.xlu0 %647
    %v651 = vsel %vm421, %v610, 0
    %v654 = vsel %vm421, %v611, 0
    %v657 = vsel %vm421, %v612, 0
    %v660 = vsel %vm421, %v613, 0
    %v663 = vsel %vm421, %v614, 0
    %v666 = vsel %vm421, %v615, 0
    %v669 = vsel %vm421, %v616, 0
    %v672 = vsel %vm421, %v617, 0
    %674 = vmatpush.msra.mxu0 0.0
    %675 = vmatpush.msra.mxu0 0.0
    %676 = vmatpush.msra.mxu0 0.0
    %677 = vmatpush.msra.mxu0 0.0
    %678 = vmatpush.msra.mxu0 0.0
    %679 = vmatpush.msra.mxu0 0.0
    %680 = vmatpush.msra.mxu0 0.0
    %681 = vmatpush.msra.mxu0 0.0
    %682 = vmatpush.msra.mxu0 %v608
    %683 = vmatpush.msra.mxu0 %v607
    %684 = vmatpush.msra.mxu0 %v606
    %685 = vmatpush.msra.mxu0 %v605
    %686 = vmatpush.msra.mxu0 %v604
    %687 = vmatpush.msra.mxu0 %v603
    %688 = vmatpush.msra.mxu0 %v602
    %689 = vmatpush.msra.mxu0 %v601
    %690 = vmatmul.f32.gmra.mxu0 %v651
    %v691 = vpop.f32.mrf.mxu0
    %v692 = vadd.f32 %v620, %v691
    %693 = vmatmul.f32.gmra.mxu0 %v654
    %v694 = vpop.f32.mrf.mxu0
    %v695 = vadd.f32 %v624, %v694
    %696 = vmatmul.f32.gmra.mxu0 %v657
    %v697 = vpop.f32.mrf.mxu0
    %v698 = vadd.f32 %v628, %v697
    %699 = vmatmul.f32.gmra.mxu0 %v660
    %v700 = vpop.f32.mrf.mxu0
    %v701 = vadd.f32 %v632, %v700
    %702 = vmatmul.f32.gmra.mxu0 %v663
    %v703 = vpop.f32.mrf.mxu0
    %v704 = vadd.f32 %v636, %v703
    %705 = vmatmul.f32.gmra.mxu0 %v666
    %v706 = vpop.f32.mrf.mxu0
    %v707 = vadd.f32 %v640, %v706
    %708 = vmatmul.f32.gmra.mxu0 %v669
    %v709 = vpop.f32.mrf.mxu0
    %v710 = vadd.f32 %v644, %v709
    %711 = vmatmul.f32.gmra.mxu0 %v672
    %v712 = vpop.f32.mrf.mxu0
    %v713 = vadd.f32 %v648, %v712
    %714 = vdwg.mxu0
    %v715 = vmax.f32 %v692, 0.0
    %v716 = vmax.f32 %v695, 0.0
    %v717 = vmax.f32 %v698, 0.0
    %v718 = vmax.f32 %v701, 0.0
    %v719 = vmax.f32 %v704, 0.0
    %v720 = vmax.f32 %v707, 0.0
    %v721 = vmax.f32 %v710, 0.0
    %v722 = vmax.f32 %v713, 0.0
    %s723 = scalar_lea.vmem [#allocation6], 192
    %v724 = vld [vmem:[%s723] sm:$0xff]
    %v725 = vld [vmem:[%s723 + $0x8] sm:$0xff]
    %v726 = vld [vmem:[%s723 + $0x10] sm:$0xff]
    %v727 = vld [vmem:[%s723 + $0x18] sm:$0xff]
    %v728 = vld [vmem:[%s723 + $0x20] sm:$0xff]
    %v729 = vld [vmem:[%s723 + $0x28] sm:$0xff]
    %v730 = vld [vmem:[%s723 + $0x30] sm:$0xff]
    %v731 = vld [vmem:[%s723 + $0x38] sm:$0xff]
    %732 = vset.pattern.permute.xlu0 5
    %733 = vperm.xlu0 %732, %v55
    %v734 = vpop.permute.xlu0 %733
    %736 = vset.pattern.permute.xlu0 5
    %737 = vperm.xlu0 %736, %v56
    %v738 = vpop.permute.xlu0 %737
    %740 = vset.pattern.permute.xlu0 5
    %741 = vperm.xlu0 %740, %v57
    %v742 = vpop.permute.xlu0 %741
    %744 = vset.pattern.permute.xlu0 5
    %745 = vperm.xlu0 %744, %v58
    %v746 = vpop.permute.xlu0 %745
    %748 = vset.pattern.permute.xlu0 5
    %749 = vperm.xlu0 %748, %v59
    %v750 = vpop.permute.xlu0 %749
    %752 = vset.pattern.permute.xlu0 5
    %753 = vperm.xlu0 %752, %v60
    %v754 = vpop.permute.xlu0 %753
    %756 = vset.pattern.permute.xlu0 5
    %757 = vperm.xlu0 %756, %v61
    %v758 = vpop.permute.xlu0 %757
    %760 = vset.pattern.permute.xlu0 5
    %761 = vperm.xlu0 %760, %v62
    %v762 = vpop.permute.xlu0 %761
    %v764 = vmul.f32 %v734, %v127
    %v765 = vmul.f32 %v738, %v127
    %v766 = vmul.f32 %v742, %v127
    %v767 = vmul.f32 %v746, %v127
    %v768 = vmul.f32 %v750, %v127
    %v769 = vmul.f32 %v754, %v127
    %v770 = vmul.f32 %v758, %v127
    %v771 = vmul.f32 %v762, %v127
    %v773 = vsel %vm421, %v724, 0
    %v776 = vsel %vm421, %v725, 0
    %v779 = vsel %vm421, %v726, 0
    %v782 = vsel %vm421, %v727, 0
    %v785 = vsel %vm421, %v728, 0
    %v788 = vsel %vm421, %v729, 0
    %v791 = vsel %vm421, %v730, 0
    %v794 = vsel %vm421, %v731, 0
    %796 = vmatpush.msra.mxu0 0.0
    %797 = vmatpush.msra.mxu0 0.0
    %798 = vmatpush.msra.mxu0 0.0
    %799 = vmatpush.msra.mxu0 0.0
    %800 = vmatpush.msra.mxu0 0.0
    %801 = vmatpush.msra.mxu0 0.0
    %802 = vmatpush.msra.mxu0 0.0
    %803 = vmatpush.msra.mxu0 0.0
    %804 = vmatpush.msra.mxu0 %v722
    %805 = vmatpush.msra.mxu0 %v721
    %806 = vmatpush.msra.mxu0 %v720
    %807 = vmatpush.msra.mxu0 %v719
    %808 = vmatpush.msra.mxu0 %v718
    %809 = vmatpush.msra.mxu0 %v717
    %810 = vmatpush.msra.mxu0 %v716
    %811 = vmatpush.msra.mxu0 %v715
    %812 = vmatmul.f32.gmra.mxu0 %v773
    %v813 = vpop.f32.mrf.mxu0
    %v814 = vadd.f32 %v764, %v813
    %815 = vmatmul.f32.gmra.mxu0 %v776
    %v816 = vpop.f32.mrf.mxu0
    %v817 = vadd.f32 %v765, %v816
    %818 = vmatmul.f32.gmra.mxu0 %v779
    %v819 = vpop.f32.mrf.mxu0
    %v820 = vadd.f32 %v766, %v819
    %821 = vmatmul.f32.gmra.mxu0 %v782
    %v822 = vpop.f32.mrf.mxu0
    %v823 = vadd.f32 %v767, %v822
    %824 = vmatmul.f32.gmra.mxu0 %v785
    %v825 = vpop.f32.mrf.mxu0
    %v826 = vadd.f32 %v768, %v825
    %827 = vmatmul.f32.gmra.mxu0 %v788
    %v828 = vpop.f32.mrf.mxu0
    %v829 = vadd.f32 %v769, %v828
    %830 = vmatmul.f32.gmra.mxu0 %v791
    %v831 = vpop.f32.mrf.mxu0
    %v832 = vadd.f32 %v770, %v831
    %833 = vmatmul.f32.gmra.mxu0 %v794
    %v834 = vpop.f32.mrf.mxu0
    %v835 = vadd.f32 %v771, %v834
    %836 = vdwg.mxu0
    %837 = vset.pattern.permute.xlu0 10
    %838 = vperm.xlu0 %837, %v55
    %v839 = vpop.permute.xlu0 %838
    %841 = vset.pattern.permute.xlu0 10
    %842 = vperm.xlu0 %841, %v56
    %v843 = vpop.permute.xlu0 %842
    %845 = vset.pattern.permute.xlu0 10
    %846 = vperm.xlu0 %845, %v57
    %v847 = vpop.permute.xlu0 %846
    %849 = vset.pattern.permute.xlu0 10
    %850 = vperm.xlu0 %849, %v58
    %v851 = vpop.permute.xlu0 %850
    %853 = vset.pattern.permute.xlu0 10
    %854 = vperm.xlu0 %853, %v59
    %v855 = vpop.permute.xlu0 %854
    %857 = vset.pattern.permute.xlu0 10
    %858 = vperm.xlu0 %857, %v60
    %v859 = vpop.permute.xlu0 %858
    %861 = vset.pattern.permute.xlu0 10
    %862 = vperm.xlu0 %861, %v61
    %v863 = vpop.permute.xlu0 %862
    %865 = vset.pattern.permute.xlu0 10
    %866 = vperm.xlu0 %865, %v62
    %v867 = vpop.permute.xlu0 %866
    %v869 = vadd.f32 %v814, %v839
    %v870 = vadd.f32 %v817, %v843
    %v871 = vadd.f32 %v820, %v847
    %v872 = vadd.f32 %v823, %v851
    %v873 = vadd.f32 %v826, %v855
    %v874 = vadd.f32 %v829, %v859
    %v875 = vadd.f32 %v832, %v863
    %v876 = vadd.f32 %v835, %v867
    %v877 = vmax.f32 %v869, 0.0
    %v878 = vmax.f32 %v870, 0.0
    %v879 = vmax.f32 %v871, 0.0
    %v880 = vmax.f32 %v872, 0.0
    %v881 = vmax.f32 %v873, 0.0
    %v882 = vmax.f32 %v874, 0.0
    %v883 = vmax.f32 %v875, 0.0
    %v884 = vmax.f32 %v876, 0.0
    %s885 = scalar_lea.vmem [#allocation6], 256
    %v886 = vld [vmem:[%s885] sm:$0xff]
    %v887 = vld [vmem:[%s885 + $0x8] sm:$0xff]
    %v888 = vld [vmem:[%s885 + $0x10] sm:$0xff]
    %v889 = vld [vmem:[%s885 + $0x18] sm:$0xff]
    %v890 = vld [vmem:[%s885 + $0x20] sm:$0xff]
    %v891 = vld [vmem:[%s885 + $0x28] sm:$0xff]
    %v892 = vld [vmem:[%s885 + $0x30] sm:$0xff]
    %v893 = vld [vmem:[%s885 + $0x38] sm:$0xff]
    %894 = vset.pattern.permute.xlu0 11
    %895 = vperm.xlu0 %894, %v55
    %v896 = vpop.permute.xlu0 %895
    %898 = vset.pattern.permute.xlu0 11
    %899 = vperm.xlu0 %898, %v56
    %v900 = vpop.permute.xlu0 %899
    %902 = vset.pattern.permute.xlu0 11
    %903 = vperm.xlu0 %902, %v57
    %v904 = vpop.permute.xlu0 %903
    %906 = vset.pattern.permute.xlu0 11
    %907 = vperm.xlu0 %906, %v58
    %v908 = vpop.permute.xlu0 %907
    %910 = vset.pattern.permute.xlu0 11
    %911 = vperm.xlu0 %910, %v59
    %v912 = vpop.permute.xlu0 %911
    %914 = vset.pattern.permute.xlu0 11
    %915 = vperm.xlu0 %914, %v60
    %v916 = vpop.permute.xlu0 %915
    %918 = vset.pattern.permute.xlu0 11
    %919 = vperm.xlu0 %918, %v61
    %v920 = vpop.permute.xlu0 %919
    %922 = vset.pattern.permute.xlu0 11
    %923 = vperm.xlu0 %922, %v62
    %v924 = vpop.permute.xlu0 %923
    %v927 = vsel %vm421, %v886, 0
    %v930 = vsel %vm421, %v887, 0
    %v933 = vsel %vm421, %v888, 0
    %v936 = vsel %vm421, %v889, 0
    %v939 = vsel %vm421, %v890, 0
    %v942 = vsel %vm421, %v891, 0
    %v945 = vsel %vm421, %v892, 0
    %v948 = vsel %vm421, %v893, 0
    %950 = vmatpush.msra.mxu0 0.0
    %951 = vmatpush.msra.mxu0 0.0
    %952 = vmatpush.msra.mxu0 0.0
    %953 = vmatpush.msra.mxu0 0.0
    %954 = vmatpush.msra.mxu0 0.0
    %955 = vmatpush.msra.mxu0 0.0
    %956 = vmatpush.msra.mxu0 0.0
    %957 = vmatpush.msra.mxu0 0.0
    %958 = vmatpush.msra.mxu0 %v884
    %959 = vmatpush.msra.mxu0 %v883
    %960 = vmatpush.msra.mxu0 %v882
    %961 = vmatpush.msra.mxu0 %v881
    %962 = vmatpush.msra.mxu0 %v880
    %963 = vmatpush.msra.mxu0 %v879
    %964 = vmatpush.msra.mxu0 %v878
    %965 = vmatpush.msra.mxu0 %v877
    %966 = vmatmul.f32.gmra.mxu0 %v927
    %v967 = vpop.f32.mrf.mxu0
    %v968 = vadd.f32 %v896, %v967
    %969 = vmatmul.f32.gmra.mxu0 %v930
    %v970 = vpop.f32.mrf.mxu0
    %v971 = vadd.f32 %v900, %v970
    %972 = vmatmul.f32.gmra.mxu0 %v933
    %v973 = vpop.f32.mrf.mxu0
    %v974 = vadd.f32 %v904, %v973
    %975 = vmatmul.f32.gmra.mxu0 %v936
    %v976 = vpop.f32.mrf.mxu0
    %v977 = vadd.f32 %v908, %v976
    %978 = vmatmul.f32.gmra.mxu0 %v939
    %v979 = vpop.f32.mrf.mxu0
    %v980 = vadd.f32 %v912, %v979
    %981 = vmatmul.f32.gmra.mxu0 %v942
    %v982 = vpop.f32.mrf.mxu0
    %v983 = vadd.f32 %v916, %v982
    %984 = vmatmul.f32.gmra.mxu0 %v945
    %v985 = vpop.f32.mrf.mxu0
    %v986 = vadd.f32 %v920, %v985
    %987 = vmatmul.f32.gmra.mxu0 %v948
    %v988 = vpop.f32.mrf.mxu0
    %v989 = vadd.f32 %v924, %v988
    %990 = vdwg.mxu0
    %v991 = vtanh.pop %v968
    %v992 = vtanh.pop %v971
    %v993 = vtanh.pop %v974
    %v994 = vtanh.pop %v977
    %v995 = vtanh.pop %v980
    %v996 = vtanh.pop %v983
    %v997 = vtanh.pop %v986
    %v998 = vtanh.pop %v989
    %v999 = vld [vmem:[%s5] sm:$0xff]
    %1000 = vset.pattern.permute.xlu0 12
    %1001 = vperm.xlu0 %1000, %v55
    %v1002 = vpop.permute.xlu0 %1001
    %v1005 = vsel %vm421, %v999, 0
    %1007 = vmatpush.msra.mxu0 0.0
    %1008 = vmatpush.msra.mxu0 0.0
    %1009 = vmatpush.msra.mxu0 0.0
    %1010 = vmatpush.msra.mxu0 0.0
    %1011 = vmatpush.msra.mxu0 0.0
    %1012 = vmatpush.msra.mxu0 0.0
    %1013 = vmatpush.msra.mxu0 0.0
    %1014 = vmatpush.msra.mxu0 0.0
    %1015 = vmatpush.msra.mxu0 %v998
    %1016 = vmatpush.msra.mxu0 %v997
    %1017 = vmatpush.msra.mxu0 %v996
    %1018 = vmatpush.msra.mxu0 %v995
    %1019 = vmatpush.msra.mxu0 %v994
    %1020 = vmatpush.msra.mxu0 %v993
    %1021 = vmatpush.msra.mxu0 %v992
    %1022 = vmatpush.msra.mxu0 %v991
    %1023 = vmatmul.f32.gmra.mxu0 %v1005
    %v1024 = vpop.f32.mrf.mxu0
    %v1025 = vadd.f32 %v1002, %v1024
    %1026 = vdwg.mxu0
    %vm1027 = vcmask 519168
    %1028 = vst.msk [vmem:[#allocation7] sm:$0xf] %vm1027, %v1025
    // Predicated region
    $region34: #{noise_model_forward.1} parent=1 // pred_check
      _
    $region35: #{noise_model_forward.1} parent=1 // pred_check_branch
      %1030 = sbr.rel (0) target = $region37
    $region36: #{noise_model_forward.1} parent=1 // pred_region
      %1032 = vsyncadd [#allocation4], 0
      %s1034 = sshll.u32 [#allocation7], 4
      %s1035 = int_to_ptr.vmem [resolvable:$true] %s1034
      %s1036 = sshll.u32 %s6, 4
      %s1037 = int_to_ptr.hbm [resolvable:$true] %s1036
      %1039 = dma.vmem_to_hbm [thread:$0]  %s1035, 64, %s1037, [#allocation4]
    $region37: #{noise_model_forward.1} parent=1 // pred_fallthru
      _
    // Predicated region
    $region38: #{noise_model_forward.1} parent=1 // pred_check
      _
    $region39: #{noise_model_forward.1} parent=1 // pred_check_branch
      %1041 = sbr.rel (0) target = $region41
    $region40: #{noise_model_forward.1} parent=1 // pred_region
      %1043 = dma.done [#allocation4], 64
    $region41: #{noise_model_forward.1} parent=1 // pred_fallthru
      _
    %1044 = vsyncpa [#allocation3], 1
    %1045 = vsyncpa [#allocation4], 1
    %1046 = vsyncpa [#allocation5], 1

</llo_original>
